<compile_context>
chip_gen: v7x
topology: tpu7x:2x2x1
jax: 0.10.0
libtpu: 0.0.40
codegen_flags: <defaults>
</compile_context>

<pallas_src>
import functools

import jax
import jax.numpy as jnp
from jax.experimental import pallas as pl
from jax.experimental.pallas import tpu as pltpu


_VMEM_LIMIT = 32 * 1024 * 1024     # <= v7x physical 64 MiB; all working sets are < 10 MiB


def _cparams(semantics=("parallel",)):
    return pltpu.CompilerParams(dimension_semantics=semantics,
                                vmem_limit_bytes=_VMEM_LIMIT)


# ----------------------------- Pallas kernels ------------------------------------

def _matmul_affine_kernel(x_ref, w_ref, s_ref, b_ref, o_ref, *, act):
    # Fused: (x @ w) * scale + bias, optional ReLU.  bf16 operands, f32 accumulate.
    y = jnp.dot(x_ref[...], w_ref[...], preferred_element_type=jnp.float32)
    y = y * s_ref[...] + b_ref[...]
    if act == "relu":
        y = jnp.maximum(y, 0.0)
    o_ref[...] = y.astype(o_ref.dtype)


def matmul_affine(x, w, scale, bias, *, act="none"):
    """Pointwise conv / im2col conv: (x @ w) * scale + bias (+ act).  Out bf16."""
    M, K = x.shape
    _, N = w.shape
    TM = M if M <= 512 else 512            # large row tiles amortize per-step overhead
    kernel = functools.partial(_matmul_affine_kernel, act=act)
    return pl.pallas_call(
        kernel,
        grid=(pl.cdiv(M, TM),),            # no input padding; partial block is masked
        in_specs=[
            pl.BlockSpec((TM, K), lambda i: (i, 0)),
            pl.BlockSpec((K, N), lambda i: (0, 0)),
            pl.BlockSpec((1, N), lambda i: (0, 0)),
            pl.BlockSpec((1, N), lambda i: (0, 0)),
        ],
        out_specs=pl.BlockSpec((TM, N), lambda i: (i, 0)),
        out_shape=jax.ShapeDtypeStruct((M, N), jnp.bfloat16),
        compiler_params=_cparams(),
    )(x, w, scale, bias)


def _dwpw_kernel(p_ref, dw_ref, ds_ref, db_ref, pw_ref, ps_ref, pb_ref, o_ref, *, act):
    # Fused depthwise 3x3 (+BN) -> 1x1 conv (+BN, +ReLU).  The dw result stays in VMEM
    # and feeds the MXU directly (no HBM round trip).
    dw = dw_ref[...]                                         # (9, C) f32
    acc = p_ref[0].astype(jnp.float32) * dw[0:1, :]
    for k in range(1, 9):
        acc = acc + p_ref[k].astype(jnp.float32) * dw[k:k + 1, :]
    y = acc * ds_ref[...] + db_ref[...]                      # dw BN (no activation)
    y = jnp.dot(y.astype(jnp.bfloat16), pw_ref[...],
                preferred_element_type=jnp.float32)          # fused 1x1 conv on the MXU
    y = y * ps_ref[...] + pb_ref[...]
    if act == "relu":
        y = jnp.maximum(y, 0.0)
    o_ref[...] = y.astype(o_ref.dtype)


def dwpw_fused(taps, dwp, pwp, *, act="relu"):
    """taps: (9, P, C) tap-leading patches -> (P, N) output of dw+pw block."""
    K9, P, C = taps.shape
    N = pwp["w"].shape[1]
    TP = P if P <= 512 else 512
    kernel = functools.partial(_dwpw_kernel, act=act)
    return pl.pallas_call(
        kernel,
        grid=(pl.cdiv(P, TP),),
        in_specs=[
            pl.BlockSpec((K9, TP, C), lambda i: (0, i, 0)),
            pl.BlockSpec((K9, C), lambda i: (0, 0)),
            pl.BlockSpec((1, C), lambda i: (0, 0)),
            pl.BlockSpec((1, C), lambda i: (0, 0)),
            pl.BlockSpec((C, N), lambda i: (0, 0)),
            pl.BlockSpec((1, N), lambda i: (0, 0)),
            pl.BlockSpec((1, N), lambda i: (0, 0)),
        ],
        out_specs=pl.BlockSpec((TP, N), lambda i: (i, 0)),
        out_shape=jax.ShapeDtypeStruct((P, N), jnp.bfloat16),
        compiler_params=_cparams(),
    )(taps, dwp["w"], dwp["scale"], dwp["bias"], pwp["w"], pwp["scale"], pwp["bias"])


def _maxpool_kernel(p_ref, o_ref):
    m = p_ref[0].astype(jnp.float32)
    for k in range(1, 9):
        m = jnp.maximum(m, p_ref[k].astype(jnp.float32))
    o_ref[...] = m.astype(o_ref.dtype)


def maxpool_taps(taps):
    K9, P, C = taps.shape
    TP = P if P <= 512 else 512
    return pl.pallas_call(
        _maxpool_kernel,
        grid=(pl.cdiv(P, TP),),
        in_specs=[pl.BlockSpec((K9, TP, C), lambda i: (0, i, 0))],
        out_specs=pl.BlockSpec((TP, C), lambda i: (i, 0)),
        out_shape=jax.ShapeDtypeStruct((P, C), jnp.bfloat16),
        compiler_params=_cparams(),
    )(taps)


def _head_kernel(x_ref, w_ref, b_ref, o_ref):
    # Linear(featuresize -> 1) + tanh as a lane-dense multiply + reduce (VPU/XLU),
    # avoiding a (featuresize, 1) MXU weight whose lane padding would waste VMEM.
    x = x_ref[...].astype(jnp.float32)          # (M, K)
    w = w_ref[...].astype(jnp.float32)          # (1, K)
    y = jnp.sum(x * w, axis=-1, keepdims=True) + b_ref[...]
    o_ref[...] = jnp.tanh(y)


def head_tanh(x, w, b):
    M, K = x.shape
    return pl.pallas_call(
        _head_kernel,
        grid=(1,),
        in_specs=[
            pl.BlockSpec((M, K), lambda i: (0, 0)),
            pl.BlockSpec((1, K), lambda i: (0, 0)),
            pl.BlockSpec((1, 1), lambda i: (0, 0)),
        ],
        out_specs=pl.BlockSpec((M, 1), lambda i: (0, 0)),
        out_shape=jax.ShapeDtypeStruct((M, 1), jnp.float32),
        compiler_params=_cparams(("arbitrary",)),
    )(x, w, b)


# ------------------------------ JAX glue ------------------------------------------

def _extract_taps(x, k, stride, pad, pad_value):
    """x: [N,H,W,C] -> taps [k*k, N, Ho, Wo, C].

    Taps are stacked on a LEADING axis so each tap is a dense (rows, C) slab when
    read inside the kernels (no strided sublane access)."""
    N, H, W, C = x.shape
    Ho = (H + 2 * pad - k) // stride + 1
    Wo = (W + 2 * pad - k) // stride + 1
    xp = jnp.pad(x, ((0, 0), (pad, pad), (pad, pad), (0, 0)),
                 constant_values=pad_value)
    taps = []
    for i in range(k):
        for j in range(k):
            taps.append(xp[:, i:i + stride * (Ho - 1) + 1:stride,
                              j:j + stride * (Wo - 1) + 1:stride, :])
    return jnp.stack(taps, axis=0), (N, Ho, Wo, C)


@functools.partial(jax.jit, static_argnames=("stride", "act"))
def conv3x3_bn(x, p, *, stride, act):
    # Full 3x3 conv via im2col (only used for conv1, cin=3 so K=27 is tiny).
    taps, (N, Ho, Wo, C) = _extract_taps(x, 3, stride, 1, 0.0)
    P = N * Ho * Wo
    # Columns are (kh, kw, cin)-ordered to match the synthetic (9*cin, cout) weight.
    # TODO(synk): real pretrained PyTorch weights are (cout, cin, kh, kw); they would
    # need a (cin, kh, kw) -> (kh, kw, cin) permutation before flattening.
    cols = jnp.transpose(taps.reshape(9, P, C), (1, 0, 2)).reshape(P, 9 * C)
    y = matmul_affine(cols, p["w"], p["scale"], p["bias"], act=act)
    return y.reshape(N, Ho, Wo, -1)


@functools.partial(jax.jit, static_argnames=("act",))
def conv1x1_bn(x, p, *, act):
    N, H, W, C = x.shape
    y = matmul_affine(x.reshape(N * H * W, C), p["w"], p["scale"], p["bias"], act=act)
    return y.reshape(N, H, W, -1)


@functools.partial(jax.jit, static_argnames=("stride", "act"))
def dwpw_bn(x, dwp, pwp, *, stride, act="relu"):
    # Depthwise 3x3 + BN fused with the following 1x1 conv + BN + ReLU.
    taps, (N, Ho, Wo, C) = _extract_taps(x, 3, stride, 1, 0.0)
    y = dwpw_fused(taps.reshape(9, N * Ho * Wo, C), dwp, pwp, act=act)
    return y.reshape(N, Ho, Wo, -1)


@jax.jit
def maxpool3x3_s2(x):
    taps, (N, Ho, Wo, C) = _extract_taps(x, 3, 2, 1, -jnp.inf)
    y = maxpool_taps(taps.reshape(9, N * Ho * Wo, C))
    return y.reshape(N, Ho, Wo, C)


@jax.jit
def concat_shuffle(a, b):
    # concat + channel shuffle (groups=2).  Kept as XLA glue; folding the permutation
    # into adjacent conv weights is blocked by the identity pass-through branch.
    x = jnp.concatenate([a, b], axis=-1)
    N, H, W, C = x.shape
    x = x.reshape(N, H, W, 2, C // 2)
    x = jnp.transpose(x, (0, 1, 2, 4, 3))
    return x.reshape(N, H, W, C)


@jax.jit
def head_forward(x_nhwc, w, b):
    n = x_nhwc.shape[0]
    x = jnp.transpose(x_nhwc, (0, 3, 1, 2)).reshape(n, -1)   # torch.flatten(x, 1) order
    return head_tanh(x, w, b)


def inverted_residual(x, blk):
    if blk["stride"] == 1:
        c = x.shape[-1]
        x1, x2 = x[..., : c // 2], x[..., c // 2:]
        b2 = conv1x1_bn(x2, blk["b2_pw1"], act="relu")
        b2 = dwpw_bn(b2, blk["b2_dw"], blk["b2_pw2"], stride=1, act="relu")
        out = concat_shuffle(x1, b2)
    else:
        # NOTE: branch1's 1x1 consumes the dw output and branch2's first 1x1 consumes x
        # at the input resolution, so those two matmuls cannot be concatenated; instead
        # each dw conv is fused with its own following 1x1 conv.
        b1 = dwpw_bn(x, blk["b1_dw"], blk["b1_pw"], stride=2, act="relu")
        b2 = conv1x1_bn(x, blk["b2_pw1"], act="relu")
        b2 = dwpw_bn(b2, blk["b2_dw"], blk["b2_pw2"], stride=2, act="relu")
        out = concat_shuffle(b1, b2)
    return out


# --------------------------- deterministic parameters ------------------------------

class _KeyGen:
    def __init__(self, seed):
        self._key = jax.random.PRNGKey(seed)

    def __call__(self):
        self._key, k = jax.random.split(self._key)
        return k


def _make_bn(kg, c):
    # eval-mode BatchNorm folded into per-channel scale / bias (kept in f32).
    gamma = jax.random.uniform(kg(), (c,), minval=0.8, maxval=1.2)
    beta = 0.05 * jax.random.normal(kg(), (c,))
    mean = 0.05 * jax.random.normal(kg(), (c,))
    var = jax.random.uniform(kg(), (c,), minval=0.8, maxval=1.2)
    scale = gamma / jnp.sqrt(var + 1e-5)
    bias = beta - mean * scale
    return (scale.reshape(1, c).astype(jnp.float32),
            bias.reshape(1, c).astype(jnp.float32))


def _make_pw(kg, cin, cout):
    w = (jax.random.normal(kg(), (cin, cout)) / jnp.sqrt(cin)).astype(jnp.bfloat16)
    s, b = _make_bn(kg, cout)
    return {"w": w, "scale": s, "bias": b}


def _make_conv3x3(kg, cin, cout):
    w = (jax.random.normal(kg(), (9 * cin, cout)) / jnp.sqrt(9.0 * cin)).astype(jnp.bfloat16)
    s, b = _make_bn(kg, cout)
    return {"w": w, "scale": s, "bias": b}


def _make_dw(kg, c):
    # Depthwise weights stay f32: they feed the VPU tap loop, not the MXU.
    w = (jax.random.normal(kg(), (9, c)) / 3.0).astype(jnp.float32)
    s, b = _make_bn(kg, c)
    return {"w": w, "scale": s, "bias": b}


def _make_block(kg, inp, oup, stride):
    bf = oup // 2
    blk = {"stride": stride}
    if stride == 2:
        blk["b1_dw"] = _make_dw(kg, inp)
        blk["b1_pw"] = _make_pw(kg, inp, bf)
        blk["b2_pw1"] = _make_pw(kg, inp, bf)
    else:
        blk["b2_pw1"] = _make_pw(kg, inp // 2, bf)
    blk["b2_dw"] = _make_dw(kg, bf)
    blk["b2_pw2"] = _make_pw(kg, bf, bf)
    return blk


def init_shufflenet_steer_params(input_shape=(32, 32), seed=0):
    kg = _KeyGen(seed)
    stage_repeats = (4, 8, 4)
    stage_out = (24, 116, 232, 464, 1024)          # shufflenet_v2_x1_0 widths
    params = {"conv1": _make_conv3x3(kg, 3, stage_out[0])}
    cin = stage_out[0]
    for name, reps, cout in zip(("stage2", "stage3", "stage4"),
                                stage_repeats, stage_out[1:4]):
        blocks = [_make_block(kg, cin, cout, 2)]
        for _ in range(reps - 1):
            blocks.append(_make_block(kg, cout, cout, 1))
        params[name] = blocks
        cin = cout
    params["conv5"] = _make_pw(kg, stage_out[3], stage_out[4])

    def _down(h):  # k=3, s=2, p=1
        return (h - 1) // 2 + 1

    fh, fw = input_shape
    for _ in range(5):  # conv1, maxpool, stage2/3/4 downsample blocks
        fh, fw = _down(fh), _down(fw)
    featuresize = stage_out[4] * fh * fw            # mirrors np.prod(featuresize.shape)
    # Head weight stored lane-dense as (1, featuresize) bf16 (not (featuresize, 1)).
    params["head_w"] = (jax.random.normal(kg(), (1, featuresize))
                        / jnp.sqrt(featuresize)).astype(jnp.bfloat16)
    params["head_b"] = (0.01 * jax.random.normal(kg(), (1, 1))).astype(jnp.float32)
    params["featuresize"] = featuresize
    return params


# --------------------------------- forward ----------------------------------------

def shufflenet_steer_forward(x_nchw, params):
    x = jnp.transpose(x_nchw, (0, 2, 3, 1)).astype(jnp.bfloat16)   # NCHW -> NHWC, bf16
    x = conv3x3_bn(x, params["conv1"], stride=2, act="relu")       # conv1 + BN + ReLU
    x = maxpool3x3_s2(x)                                           # maxpool 3x3 s2 p1
    for stage in ("stage2", "stage3", "stage4"):
        for blk in params[stage]:
            x = inverted_residual(x, blk)
    x = conv1x1_bn(x, params["conv5"], act="relu")                 # conv5 + BN + ReLU
    # TODO(synk): nn.Dropout() in the reference module defaults to train mode; it is
    # modeled here as the standard inference-time identity.
    return head_forward(x, params["head_w"], params["head_b"])     # linear head + tanh


if __name__ == "__main__":
    H, W = 32, 32                      # small input (module default is 150x200)
    params = init_shufflenet_steer_params((H, W), seed=0)
    x = jax.random.normal(jax.random.PRNGKey(0), (2, 3, H, W), dtype=jnp.float32)
    out = shufflenet_steer_forward(x, params)
    out = jax.block_until_ready(out)
    assert out.shape == (2, 1), out.shape
    assert bool(jnp.all(jnp.isfinite(out)))
    assert bool(jnp.all(jnp.abs(out) <= 1.0))      # tanh output range
    print("KERNEL_OK")
</pallas_src>

<mosaic_0001>
module attributes {stable_mosaic.version = 11 : i64} {
  func.func @_matmul_affine_kernel(%arg0: i32, %arg1: memref<512x27xbf16, #tpu.memory_space<vmem>>, %arg2: memref<27x24xbf16, #tpu.memory_space<vmem>>, %arg3: memref<1x24xf32, #tpu.memory_space<vmem>>, %arg4: memref<1x24xf32, #tpu.memory_space<vmem>>, %arg5: memref<512x24xbf16, #tpu.memory_space<vmem>>) attributes {dimension_semantics = [#tpu.dimension_semantics<parallel>], iteration_bounds = array<i64: 1>, scalar_prefetch = 0 : i64, scratch_operands = 0 : i64, tpu.core_type = #tpu.core_type<tc>, window_params = [{transform_indices = @transform_0, window_bounds = array<i64: 512, 27>}, {pipeline_mode = #tpu.pipeline_mode<synchronous>, transform_indices = @transform_1, window_bounds = array<i64: 27, 24>}, {pipeline_mode = #tpu.pipeline_mode<synchronous>, transform_indices = @transform_2, window_bounds = array<i64: 1, 24>}, {pipeline_mode = #tpu.pipeline_mode<synchronous>, transform_indices = @transform_3, window_bounds = array<i64: 1, 24>}, {transform_indices = @transform_4, window_bounds = array<i64: 512, 24>}]} {
    %c0 = arith.constant 0 : index
    %c0_0 = arith.constant 0 : index
    %0 = vector.load %arg1[%c0, %c0_0] : memref<512x27xbf16, #tpu.memory_space<vmem>>, vector<512x27xbf16>
    %c0_1 = arith.constant 0 : index
    %c0_2 = arith.constant 0 : index
    %1 = vector.load %arg2[%c0_1, %c0_2] : memref<27x24xbf16, #tpu.memory_space<vmem>>, vector<27x24xbf16>
    %cst = arith.constant dense<0.000000e+00> : vector<512x24xf32>
    %2 = tpu.matmul %0, %1, %cst {dimension_numbers = #tpu.dot_dimension_numbers<[1], [0], [0], [1], [0, 0, 1, 1], [], []>} : vector<512x27xbf16>, vector<27x24xbf16>, vector<512x24xf32> -> vector<512x24xf32>
    %c0_3 = arith.constant 0 : index
    %c0_4 = arith.constant 0 : index
    %3 = vector.load %arg3[%c0_3, %c0_4] : memref<1x24xf32, #tpu.memory_space<vmem>>, vector<1x24xf32>
    %4 = vector.broadcast %3 : vector<1x24xf32> to vector<512x24xf32>
    %5 = arith.mulf %2, %4 : vector<512x24xf32>
    %c0_5 = arith.constant 0 : index
    %c0_6 = arith.constant 0 : index
    %6 = vector.load %arg4[%c0_5, %c0_6] : memref<1x24xf32, #tpu.memory_space<vmem>>, vector<1x24xf32>
    %7 = vector.broadcast %6 : vector<1x24xf32> to vector<512x24xf32>
    %8 = arith.addf %5, %7 : vector<512x24xf32>
    %cst_7 = arith.constant 0.000000e+00 : f32
    %9 = vector.broadcast %cst_7 : f32 to vector<512x24xf32>
    %10 = arith.maximumf %8, %9 : vector<512x24xf32>
    %11 = arith.truncf %10 : vector<512x24xf32> to vector<512x24xbf16>
    %c0_8 = arith.constant 0 : index
    %c0_9 = arith.constant 0 : index
    %12 = vector.load %arg5[%c0_8, %c0_9] : memref<512x24xbf16, #tpu.memory_space<vmem>>, vector<512x24xbf16>
    tpu.vector_store %arg5[%c0_8, %c0_9], %11 {strides = array<i32>} : memref<512x24xbf16, #tpu.memory_space<vmem>>, vector<512x24xbf16>,
    return
  }
  func.func @transform_0(%arg0: i32) -> (i32, i32) {
    %c0_i32 = arith.constant 0 : i32
    %c0_i32_0 = arith.constant 0 : i32
    return %arg0, %c0_i32 : i32, i32
  }
  func.func @transform_1(%arg0: i32) -> (i32, i32) {
    %c0_i32 = arith.constant 0 : i32
    %c0_i32_0 = arith.constant 0 : i32
    %c0_i32_1 = arith.constant 0 : i32
    return %c0_i32, %c0_i32_0 : i32, i32
  }
  func.func @transform_2(%arg0: i32) -> (i32, i32) {
    %c0_i32 = arith.constant 0 : i32
    %c0_i32_0 = arith.constant 0 : i32
    %c0_i32_1 = arith.constant 0 : i32
    return %c0_i32, %c0_i32_0 : i32, i32
  }
  func.func @transform_3(%arg0: i32) -> (i32, i32) {
    %c0_i32 = arith.constant 0 : i32
    %c0_i32_0 = arith.constant 0 : i32
    %c0_i32_1 = arith.constant 0 : i32
    return %c0_i32, %c0_i32_0 : i32, i32
  }
  func.func @transform_4(%arg0: i32) -> (i32, i32) {
    %c0_i32 = arith.constant 0 : i32
    %c0_i32_0 = arith.constant 0 : i32
    return %arg0, %c0_i32 : i32, i32
  }
}

</mosaic_0001>

<llo_original>
// kernel: conv3x3_bn.1
$region0: #{conv3x3_bn.1}
  #allocation0 [shape = 'u32[]', space=smem, size = 0x4, offset = 0x4, fixed_abs, tag = 'smem constant byte address 0x4 - core index']
  #allocation1 [shape = 'u32[144,128]{1,0:T(1,128)}', space=vmem, size = 0x12000, scoped, tag = 'internal scratch']
  %s0 = inlined_call_operand.vmem [shape: bf16[512,27], index: 0, kind: input, shape index: {}]
  %s1 = inlined_call_operand.vmem [shape: bf16[27,24], index: 1, kind: input, shape index: {}]
  %s2 = inlined_call_operand.vmem [shape: f32[1,24], index: 2, kind: input, shape index: {}]
  %s3 = inlined_call_operand.vmem [shape: f32[1,24], index: 3, kind: input, shape index: {}]
  %s4 = inlined_call_operand.hbm [shape: bf16[512,24], index: 4, kind: output, shape index: {}]
  %s5 = sld [smem:[#allocation0]]
  $region26: #{conv3x3_bn.1} parent=0
    _
  %s7 = ssub.s32 1, %s5
  %s8 = scalar_select 0, %s7, %s5
  $region1: #{conv3x3_bn.1} parent=0
    #allocation2 [shape = 'u8[131072]{0}', space=vmem, size = 0x20000, scoped, tag = 'output window, operand 0, single buffered']
    #allocation3 [shape = 's32[1]{0}', space=sflag, size = 0x4, scoped, tag = 'scoped memory for conv3x3_bn.1']
    %9 = vsyncpa [#allocation3], 0
    // Predicated region
    $region2: #{conv3x3_bn.1} parent=1 // pred_check
      _
    $region3: #{conv3x3_bn.1} parent=1 // pred_check_branch
      %11 = sbr.rel (0) target = $region5
    $region4: #{conv3x3_bn.1} parent=1 // pred_region
      _
    $region5: #{conv3x3_bn.1} parent=1 // pred_fallthru
      _
    // Predicated region
    $region6: #{conv3x3_bn.1} parent=1 // pred_check
      _
    $region7: #{conv3x3_bn.1} parent=1 // pred_check_branch
      %13 = sbr.rel (0) target = $region9
    $region8: #{conv3x3_bn.1} parent=1 // pred_region
      _
    $region9: #{conv3x3_bn.1} parent=1 // pred_fallthru
      _
    // Predicated region
    $region10: #{conv3x3_bn.1} parent=1 // pred_check
      _
    $region11: #{conv3x3_bn.1} parent=1 // pred_check_branch
      %15 = sbr.rel (0) target = $region13
    $region12: #{conv3x3_bn.1} parent=1 // pred_region
      _
    $region13: #{conv3x3_bn.1} parent=1 // pred_fallthru
      _
    // Predicated region
    $region14: #{conv3x3_bn.1} parent=1 // pred_check
      _
    $region15: #{conv3x3_bn.1} parent=1 // pred_check_branch
      %17 = sbr.rel (0) target = $region17
    $region16: #{conv3x3_bn.1} parent=1 // pred_region
      _
    $region17: #{conv3x3_bn.1} parent=1 // pred_fallthru
      _
    %v19 = vld [vmem:[%s0] sm:$0xf]
    %v20 = vld [vmem:[%s0 + $0x4] sm:$0xf]
    %v21 = vld [vmem:[%s0 + $0x8] sm:$0xf]
    %v22 = vld [vmem:[%s0 + $0xc] sm:$0xf]
    %v23 = vld [vmem:[%s0 + $0x10] sm:$0xf]
    %v24 = vld [vmem:[%s0 + $0x14] sm:$0xf]
    %v25 = vld [vmem:[%s0 + $0x18] sm:$0xf]
    %v26 = vld [vmem:[%s0 + $0x1c] sm:$0xf]
    %v27 = vld [vmem:[%s0 + $0x20] sm:$0xf]
    %v28 = vld [vmem:[%s0 + $0x24] sm:$0xf]
    %v29 = vld [vmem:[%s0 + $0x28] sm:$0xf]
    %v30 = vld [vmem:[%s0 + $0x2c] sm:$0xf]
    %v31 = vld [vmem:[%s0 + $0x30] sm:$0xf]
    %v32 = vld [vmem:[%s0 + $0x34] sm:$0xf]
    %v33 = vld [vmem:[%s0 + $0x38] sm:$0xf]
    %v34 = vld [vmem:[%s0 + $0x3c] sm:$0xf]
    %v35 = vld [vmem:[%s0 + $0x40] sm:$0xf]
    %v36 = vld [vmem:[%s0 + $0x44] sm:$0xf]
    %v37 = vld [vmem:[%s0 + $0x48] sm:$0xf]
    %v38 = vld [vmem:[%s0 + $0x4c] sm:$0xf]
    %v39 = vld [vmem:[%s0 + $0x50] sm:$0xf]
    %v40 = vld [vmem:[%s0 + $0x54] sm:$0xf]
    %v41 = vld [vmem:[%s0 + $0x58] sm:$0xf]
    %v42 = vld [vmem:[%s0 + $0x5c] sm:$0xf]
    %v43 = vld [vmem:[%s0 + $0x60] sm:$0xf]
    %v44 = vld [vmem:[%s0 + $0x64] sm:$0xf]
    %v45 = vld [vmem:[%s0 + $0x68] sm:$0xf]
    %v46 = vld [vmem:[%s0 + $0x6c] sm:$0xf]
    %v47 = vld [vmem:[%s0 + $0x70] sm:$0xf]
    %v48 = vld [vmem:[%s0 + $0x74] sm:$0xf]
    %v49 = vld [vmem:[%s0 + $0x78] sm:$0xf]
    %v50 = vld [vmem:[%s0 + $0x7c] sm:$0xf]
    %v51 = vld [vmem:[%s0 + $0x80] sm:$0xf]
    %v52 = vld [vmem:[%s0 + $0x84] sm:$0xf]
    %v53 = vld [vmem:[%s0 + $0x88] sm:$0xf]
    %v54 = vld [vmem:[%s0 + $0x8c] sm:$0xf]
    %v55 = vld [vmem:[%s0 + $0x90] sm:$0xf]
    %v56 = vld [vmem:[%s0 + $0x94] sm:$0xf]
    %v57 = vld [vmem:[%s0 + $0x98] sm:$0xf]
    %v58 = vld [vmem:[%s0 + $0x9c] sm:$0xf]
    %v59 = vld [vmem:[%s0 + $0xa0] sm:$0xf]
    %v60 = vld [vmem:[%s0 + $0xa4] sm:$0xf]
    %v61 = vld [vmem:[%s0 + $0xa8] sm:$0xf]
    %v62 = vld [vmem:[%s0 + $0xac] sm:$0xf]
    %v63 = vld [vmem:[%s0 + $0xb0] sm:$0xf]
    %v64 = vld [vmem:[%s0 + $0xb4] sm:$0xf]
    %v65 = vld [vmem:[%s0 + $0xb8] sm:$0xf]
    %v66 = vld [vmem:[%s0 + $0xbc] sm:$0xf]
    %v67 = vld [vmem:[%s0 + $0xc0] sm:$0xf]
    %v68 = vld [vmem:[%s0 + $0xc4] sm:$0xf]
    %v69 = vld [vmem:[%s0 + $0xc8] sm:$0xf]
    %v70 = vld [vmem:[%s0 + $0xcc] sm:$0xf]
    %v71 = vld [vmem:[%s0 + $0xd0] sm:$0xf]
    %v72 = vld [vmem:[%s0 + $0xd4] sm:$0xf]
    %v73 = vld [vmem:[%s0 + $0xd8] sm:$0xf]
    %v74 = vld [vmem:[%s0 + $0xdc] sm:$0xf]
    %v75 = vld [vmem:[%s0 + $0xe0] sm:$0xf]
    %v76 = vld [vmem:[%s0 + $0xe4] sm:$0xf]
    %v77 = vld [vmem:[%s0 + $0xe8] sm:$0xf]
    %v78 = vld [vmem:[%s0 + $0xec] sm:$0xf]
    %v79 = vld [vmem:[%s0 + $0xf0] sm:$0xf]
    %v80 = vld [vmem:[%s0 + $0xf4] sm:$0xf]
    %v81 = vld [vmem:[%s0 + $0xf8] sm:$0xf]
    %v82 = vld [vmem:[%s0 + $0xfc] sm:$0xf]
    %v83 = vld [vmem:[%s1] sm:$0xf]
    %v84 = vld [vmem:[%s1 + $0x4] sm:$0xf]
    %v85 = vld [vmem:[%s1 + $0x8] sm:$0xf]
    %v86 = vld [vmem:[%s1 + $0xc] sm:$0x3]
    %v151 = vunpack.c.l.b16 %v19
    %v152 = vunpack.c.l.b16 %v20
    %v153 = vunpack.c.l.b16 %v21
    %v154 = vunpack.c.l.b16 %v22
    %v155 = vunpack.c.l.b16 %v23
    %v156 = vunpack.c.l.b16 %v24
    %v157 = vunpack.c.l.b16 %v25
    %v158 = vunpack.c.l.b16 %v26
    %v159 = vunpack.c.l.b16 %v27
    %v160 = vunpack.c.l.b16 %v28
    %v161 = vunpack.c.l.b16 %v29
    %v162 = vunpack.c.l.b16 %v30
    %v163 = vunpack.c.l.b16 %v31
    %v164 = vunpack.c.l.b16 %v32
    %v165 = vunpack.c.l.b16 %v33
    %v166 = vunpack.c.l.b16 %v34
    %v167 = vunpack.c.l.b16 %v35
    %v168 = vunpack.c.l.b16 %v36
    %v169 = vunpack.c.l.b16 %v37
    %v170 = vunpack.c.l.b16 %v38
    %v171 = vunpack.c.l.b16 %v39
    %v172 = vunpack.c.l.b16 %v40
    %v173 = vunpack.c.l.b16 %v41
    %v174 = vunpack.c.l.b16 %v42
    %v175 = vunpack.c.l.b16 %v43
    %v176 = vunpack.c.l.b16 %v44
    %v177 = vunpack.c.l.b16 %v45
    %v178 = vunpack.c.l.b16 %v46
    %v179 = vunpack.c.l.b16 %v47
    %v180 = vunpack.c.l.b16 %v48
    %v181 = vunpack.c.l.b16 %v49
    %v182 = vunpack.c.l.b16 %v50
    %v183 = vunpack.c.l.b16 %v51
    %v184 = vunpack.c.l.b16 %v52
    %v185 = vunpack.c.l.b16 %v53
    %v186 = vunpack.c.l.b16 %v54
    %v187 = vunpack.c.l.b16 %v55
    %v188 = vunpack.c.l.b16 %v56
    %v189 = vunpack.c.l.b16 %v57
    %v190 = vunpack.c.l.b16 %v58
    %v191 = vunpack.c.l.b16 %v59
    %v192 = vunpack.c.l.b16 %v60
    %v193 = vunpack.c.l.b16 %v61
    %v194 = vunpack.c.l.b16 %v62
    %v195 = vunpack.c.l.b16 %v63
    %v196 = vunpack.c.l.b16 %v64
    %v197 = vunpack.c.l.b16 %v65
    %v198 = vunpack.c.l.b16 %v66
    %v199 = vunpack.c.l.b16 %v67
    %v200 = vunpack.c.l.b16 %v68
    %v201 = vunpack.c.l.b16 %v69
    %v202 = vunpack.c.l.b16 %v70
    %v203 = vunpack.c.l.b16 %v71
    %v204 = vunpack.c.l.b16 %v72
    %v205 = vunpack.c.l.b16 %v73
    %v206 = vunpack.c.l.b16 %v74
    %v207 = vunpack.c.l.b16 %v75
    %v208 = vunpack.c.l.b16 %v76
    %v209 = vunpack.c.l.b16 %v77
    %v210 = vunpack.c.l.b16 %v78
    %v211 = vunpack.c.l.b16 %v79
    %v212 = vunpack.c.l.b16 %v80
    %v213 = vunpack.c.l.b16 %v81
    %v214 = vunpack.c.l.b16 %v82
    %v215 = vpack.c.b16 %v152, %v151
    %v216 = vpack.c.b16 %v154, %v153
    %v217 = vpack.c.b16 %v156, %v155
    %v218 = vpack.c.b16 %v158, %v157
    %v219 = vpack.c.b16 %v160, %v159
    %v220 = vpack.c.b16 %v162, %v161
    %v221 = vpack.c.b16 %v164, %v163
    %v222 = vpack.c.b16 %v166, %v165
    %v223 = vpack.c.b16 %v168, %v167
    %v224 = vpack.c.b16 %v170, %v169
    %v225 = vpack.c.b16 %v172, %v171
    %v226 = vpack.c.b16 %v174, %v173
    %v227 = vpack.c.b16 %v176, %v175
    %v228 = vpack.c.b16 %v178, %v177
    %v229 = vpack.c.b16 %v180, %v179
    %v230 = vpack.c.b16 %v182, %v181
    %v231 = vpack.c.b16 %v184, %v183
    %v232 = vpack.c.b16 %v186, %v185
    %v233 = vpack.c.b16 %v188, %v187
    %v234 = vpack.c.b16 %v190, %v189
    %v235 = vpack.c.b16 %v192, %v191
    %v236 = vpack.c.b16 %v194, %v193
    %v237 = vpack.c.b16 %v196, %v195
    %v238 = vpack.c.b16 %v198, %v197
    %v239 = vpack.c.b16 %v200, %v199
    %v240 = vpack.c.b16 %v202, %v201
    %v241 = vpack.c.b16 %v204, %v203
    %v242 = vpack.c.b16 %v206, %v205
    %v243 = vpack.c.b16 %v208, %v207
    %v244 = vpack.c.b16 %v210, %v209
    %v245 = vpack.c.b16 %v212, %v211
    %v246 = vpack.c.b16 %v214, %v213
    %v251 = vunpack.c.l.b16 %v83
    %v252 = vunpack.c.l.b16 %v84
    %v253 = vunpack.c.l.b16 %v85
    %v254 = vunpack.c.l.b16 %v86
    %v255 = vpack.c.b16 %v252, %v251
    %v256 = vpack.c.b16 %v254, %v253
    %vm258 = vcmask 220160
    %v260 = vsel %vm258, %v215, 0
    %v263 = vsel %vm258, %v216, 0
    %v266 = vsel %vm258, %v217, 0
    %v269 = vsel %vm258, %v218, 0
    %v272 = vsel %vm258, %v219, 0
    %v275 = vsel %vm258, %v220, 0
    %v278 = vsel %vm258, %v221, 0
    %v281 = vsel %vm258, %v222, 0
    %v284 = vsel %vm258, %v223, 0
    %v287 = vsel %vm258, %v224, 0
    %v290 = vsel %vm258, %v225, 0
    %v293 = vsel %vm258, %v226, 0
    %v296 = vsel %vm258, %v227, 0
    %v299 = vsel %vm258, %v228, 0
    %v302 = vsel %vm258, %v229, 0
    %v305 = vsel %vm258, %v230, 0
    %v308 = vsel %vm258, %v231, 0
    %v311 = vsel %vm258, %v232, 0
    %v314 = vsel %vm258, %v233, 0
    %v317 = vsel %vm258, %v234, 0
    %v320 = vsel %vm258, %v235, 0
    %v323 = vsel %vm258, %v236, 0
    %v326 = vsel %vm258, %v237, 0
    %v329 = vsel %vm258, %v238, 0
    %v332 = vsel %vm258, %v239, 0
    %v335 = vsel %vm258, %v240, 0
    %v338 = vsel %vm258, %v241, 0
    %v341 = vsel %vm258, %v242, 0
    %v344 = vsel %vm258, %v243, 0
    %v347 = vsel %vm258, %v244, 0
    %v350 = vsel %vm258, %v245, 0
    %v353 = vsel %vm258, %v246, 0
    %vm355 = vcmask 1044480
    %vm356 = vcmask 1045504
    %v357 = vsel %vm355, 4294967295, 65535
    %v358 = vsel %vm356, %v357, 0
    %v360 = vand.u32 %v256, %v358
    %362 = vmatprep.subr.bf16.mxu0 0
    %363 = vmatpush1.bf16.msra.mxu0 %v255
    %364 = vmatprep.subr.bf16.mxu0 0
    %365 = vmatpush1.bf16.msra.mxu0 %v360
    %366 = vmatprep.subr.bf16.mxu0 0
    %367 = vmatpush1.bf16.msra.mxu0 0
    %368 = vmatprep.subr.bf16.mxu0 0
    %369 = vmatpush1.bf16.msra.mxu0 0
    %370 = vmatprep.subr.bf16.mxu0 0
    %371 = vmatpush1.bf16.msra.mxu0 0
    %372 = vmatprep.subr.bf16.mxu0 0
    %373 = vmatpush1.bf16.msra.mxu0 0
    %374 = vmatprep.subr.bf16.mxu0 0
    %375 = vmatpush1.bf16.msra.mxu0 0
    %376 = vmatprep.subr.bf16.mxu0 0
    %377 = vmatpush1.bf16.msra.mxu0 0
    %378 = vmatprep.subr.bf16.mxu0 0
    %379 = vmatpush1.bf16.msra.mxu0 0
    %380 = vmatprep.subr.bf16.mxu0 0
    %381 = vmatpush1.bf16.msra.mxu0 0
    %382 = vmatprep.subr.bf16.mxu0 0
    %383 = vmatpush1.bf16.msra.mxu0 0
    %384 = vmatprep.subr.bf16.mxu0 0
    %385 = vmatpush1.bf16.msra.mxu0 0
    %386 = vmatprep.subr.bf16.mxu0 0
    %387 = vmatpush1.bf16.msra.mxu0 0
    %388 = vmatprep.subr.bf16.mxu0 0
    %389 = vmatpush1.bf16.msra.mxu0 0
    %390 = vmatprep.subr.bf16.mxu0 0
    %391 = vmatpush1.bf16.msra.mxu0 0
    %392 = vmatprep.subr.bf16.mxu0 0
    %393 = vmatpush1.bf16.msra.mxu0 0
    %394 = vmatprep.mubr.bf16.mxu0 0
    %395 = vmatmul.mubr.bf16.gmra.mrb[0].mxu0 %v260
    %v396 = vpop.f32.mrb[0].mxu0
    %v397 = vadd.f32 0.0, %v396
    %v398 = vpop.f32.mrb[0].mxu0
    %v399 = vpop.f32.mrb[0].mxu0
    %v400 = vadd.f32 0.0, %v399
    %v401 = vpop.f32.mrb[0].mxu0
    %402 = vmatprep.mubr.bf16.mxu0 0
    %403 = vmatmul.mubr.bf16.gmra.mrb[0].mxu0 %v263
    %v404 = vpop.f32.mrb[0].mxu0
    %v405 = vadd.f32 0.0, %v404
    %v406 = vpop.f32.mrb[0].mxu0
    %v407 = vpop.f32.mrb[0].mxu0
    %v408 = vadd.f32 0.0, %v407
    %v409 = vpop.f32.mrb[0].mxu0
    %410 = vmatprep.mubr.bf16.mxu0 0
    %411 = vmatmul.mubr.bf16.gmra.mrb[0].mxu0 %v266
    %v412 = vpop.f32.mrb[0].mxu0
    %v413 = vadd.f32 0.0, %v412
    %v414 = vpop.f32.mrb[0].mxu0
    %v415 = vpop.f32.mrb[0].mxu0
    %v416 = vadd.f32 0.0, %v415
    %v417 = vpop.f32.mrb[0].mxu0
    %418 = vmatprep.mubr.bf16.mxu0 0
    %419 = vmatmul.mubr.bf16.gmra.mrb[0].mxu0 %v269
    %v420 = vpop.f32.mrb[0].mxu0
    %v421 = vadd.f32 0.0, %v420
    %v422 = vpop.f32.mrb[0].mxu0
    %v423 = vpop.f32.mrb[0].mxu0
    %v424 = vadd.f32 0.0, %v423
    %v425 = vpop.f32.mrb[0].mxu0
    %426 = vmatprep.mubr.bf16.mxu0 0
    %427 = vmatmul.mubr.bf16.gmra.mrb[0].mxu0 %v272
    %v428 = vpop.f32.mrb[0].mxu0
    %v429 = vadd.f32 0.0, %v428
    %v430 = vpop.f32.mrb[0].mxu0
    %v431 = vpop.f32.mrb[0].mxu0
    %v432 = vadd.f32 0.0, %v431
    %v433 = vpop.f32.mrb[0].mxu0
    %434 = vmatprep.mubr.bf16.mxu0 0
    %435 = vmatmul.mubr.bf16.gmra.mrb[0].mxu0 %v275
    %v436 = vpop.f32.mrb[0].mxu0
    %v437 = vadd.f32 0.0, %v436
    %v438 = vpop.f32.mrb[0].mxu0
    %v439 = vpop.f32.mrb[0].mxu0
    %v440 = vadd.f32 0.0, %v439
    %v441 = vpop.f32.mrb[0].mxu0
    %442 = vmatprep.mubr.bf16.mxu0 0
    %443 = vmatmul.mubr.bf16.gmra.mrb[0].mxu0 %v278
    %v444 = vpop.f32.mrb[0].mxu0
    %v445 = vadd.f32 0.0, %v444
    %v446 = vpop.f32.mrb[0].mxu0
    %v447 = vpop.f32.mrb[0].mxu0
    %v448 = vadd.f32 0.0, %v447
    %v449 = vpop.f32.mrb[0].mxu0
    %450 = vmatprep.mubr.bf16.mxu0 0
    %451 = vmatmul.mubr.bf16.gmra.mrb[0].mxu0 %v281
    %v452 = vpop.f32.mrb[0].mxu0
    %v453 = vadd.f32 0.0, %v452
    %v454 = vpop.f32.mrb[0].mxu0
    %v455 = vpop.f32.mrb[0].mxu0
    %v456 = vadd.f32 0.0, %v455
    %v457 = vpop.f32.mrb[0].mxu0
    %458 = vmatprep.mubr.bf16.mxu0 0
    %459 = vmatmul.mubr.bf16.gmra.mrb[0].mxu0 %v284
    %v460 = vpop.f32.mrb[0].mxu0
    %v461 = vadd.f32 0.0, %v460
    %v462 = vpop.f32.mrb[0].mxu0
    %v463 = vpop.f32.mrb[0].mxu0
    %v464 = vadd.f32 0.0, %v463
    %v465 = vpop.f32.mrb[0].mxu0
    %466 = vmatprep.mubr.bf16.mxu0 0
    %467 = vmatmul.mubr.bf16.gmra.mrb[0].mxu0 %v287
    %v468 = vpop.f32.mrb[0].mxu0
    %v469 = vadd.f32 0.0, %v468
    %v470 = vpop.f32.mrb[0].mxu0
    %v471 = vpop.f32.mrb[0].mxu0
    %v472 = vadd.f32 0.0, %v471
    %v473 = vpop.f32.mrb[0].mxu0
    %474 = vmatprep.mubr.bf16.mxu0 0
    %475 = vmatmul.mubr.bf16.gmra.mrb[0].mxu0 %v290
    %v476 = vpop.f32.mrb[0].mxu0
    %v477 = vadd.f32 0.0, %v476
    %v478 = vpop.f32.mrb[0].mxu0
    %v479 = vpop.f32.mrb[0].mxu0
    %v480 = vadd.f32 0.0, %v479
    %v481 = vpop.f32.mrb[0].mxu0
    %482 = vmatprep.mubr.bf16.mxu0 0
    %483 = vmatmul.mubr.bf16.gmra.mrb[0].mxu0 %v293
    %v484 = vpop.f32.mrb[0].mxu0
    %v485 = vadd.f32 0.0, %v484
    %v486 = vpop.f32.mrb[0].mxu0
    %v487 = vpop.f32.mrb[0].mxu0
    %v488 = vadd.f32 0.0, %v487
    %v489 = vpop.f32.mrb[0].mxu0
    %490 = vmatprep.mubr.bf16.mxu0 0
    %491 = vmatmul.mubr.bf16.gmra.mrb[0].mxu0 %v296
    %v492 = vpop.f32.mrb[0].mxu0
    %v493 = vadd.f32 0.0, %v492
    %v494 = vpop.f32.mrb[0].mxu0
    %v495 = vpop.f32.mrb[0].mxu0
    %v496 = vadd.f32 0.0, %v495
    %v497 = vpop.f32.mrb[0].mxu0
    %498 = vmatprep.mubr.bf16.mxu0 0
    %499 = vmatmul.mubr.bf16.gmra.mrb[0].mxu0 %v299
    %v500 = vpop.f32.mrb[0].mxu0
    %v501 = vadd.f32 0.0, %v500
    %v502 = vpop.f32.mrb[0].mxu0
    %v503 = vpop.f32.mrb[0].mxu0
    %v504 = vadd.f32 0.0, %v503
    %v505 = vpop.f32.mrb[0].mxu0
    %506 = vmatprep.mubr.bf16.mxu0 0
    %507 = vmatmul.mubr.bf16.gmra.mrb[0].mxu0 %v302
    %v508 = vpop.f32.mrb[0].mxu0
    %v509 = vadd.f32 0.0, %v508
    %v510 = vpop.f32.mrb[0].mxu0
    %v511 = vpop.f32.mrb[0].mxu0
    %v512 = vadd.f32 0.0, %v511
    %v513 = vpop.f32.mrb[0].mxu0
    %514 = vmatprep.mubr.bf16.mxu0 0
    %515 = vmatmul.mubr.bf16.gmra.mrb[0].mxu0 %v305
    %v516 = vpop.f32.mrb[0].mxu0
    %v517 = vadd.f32 0.0, %v516
    %v518 = vpop.f32.mrb[0].mxu0
    %v519 = vpop.f32.mrb[0].mxu0
    %v520 = vadd.f32 0.0, %v519
    %v521 = vpop.f32.mrb[0].mxu0
    %522 = vmatprep.mubr.bf16.mxu0 0
    %523 = vmatmul.mubr.bf16.gmra.mrb[0].mxu0 %v308
    %v524 = vpop.f32.mrb[0].mxu0
    %v525 = vadd.f32 0.0, %v524
    %v526 = vpop.f32.mrb[0].mxu0
    %v527 = vpop.f32.mrb[0].mxu0
    %v528 = vadd.f32 0.0, %v527
    %v529 = vpop.f32.mrb[0].mxu0
    %530 = vmatprep.mubr.bf16.mxu0 0
    %531 = vmatmul.mubr.bf16.gmra.mrb[0].mxu0 %v311
    %v532 = vpop.f32.mrb[0].mxu0
    %v533 = vadd.f32 0.0, %v532
    %v534 = vpop.f32.mrb[0].mxu0
    %v535 = vpop.f32.mrb[0].mxu0
    %v536 = vadd.f32 0.0, %v535
    %v537 = vpop.f32.mrb[0].mxu0
    %538 = vmatprep.mubr.bf16.mxu0 0
    %539 = vmatmul.mubr.bf16.gmra.mrb[0].mxu0 %v314
    %v540 = vpop.f32.mrb[0].mxu0
    %v541 = vadd.f32 0.0, %v540
    %v542 = vpop.f32.mrb[0].mxu0
    %v543 = vpop.f32.mrb[0].mxu0
    %v544 = vadd.f32 0.0, %v543
    %v545 = vpop.f32.mrb[0].mxu0
    %546 = vmatprep.mubr.bf16.mxu0 0
    %547 = vmatmul.mubr.bf16.gmra.mrb[0].mxu0 %v317
    %v548 = vpop.f32.mrb[0].mxu0
    %v549 = vadd.f32 0.0, %v548
    %v550 = vpop.f32.mrb[0].mxu0
    %v551 = vpop.f32.mrb[0].mxu0
    %v552 = vadd.f32 0.0, %v551
    %v553 = vpop.f32.mrb[0].mxu0
    %554 = vmatprep.mubr.bf16.mxu0 0
    %555 = vmatmul.mubr.bf16.gmra.mrb[0].mxu0 %v320
    %v556 = vpop.f32.mrb[0].mxu0
    %v557 = vadd.f32 0.0, %v556
    %v558 = vpop.f32.mrb[0].mxu0
    %v559 = vpop.f32.mrb[0].mxu0
    %v560 = vadd.f32 0.0, %v559
    %v561 = vpop.f32.mrb[0].mxu0
    %562 = vmatprep.mubr.bf16.mxu0 0
    %563 = vmatmul.mubr.bf16.gmra.mrb[0].mxu0 %v323
    %v564 = vpop.f32.mrb[0].mxu0
    %v565 = vadd.f32 0.0, %v564
    %v566 = vpop.f32.mrb[0].mxu0
    %v567 = vpop.f32.mrb[0].mxu0
    %v568 = vadd.f32 0.0, %v567
    %v569 = vpop.f32.mrb[0].mxu0
    %570 = vmatprep.mubr.bf16.mxu0 0
    %571 = vmatmul.mubr.bf16.gmra.mrb[0].mxu0 %v326
    %v572 = vpop.f32.mrb[0].mxu0
    %v573 = vadd.f32 0.0, %v572
    %v574 = vpop.f32.mrb[0].mxu0
    %v575 = vpop.f32.mrb[0].mxu0
    %v576 = vadd.f32 0.0, %v575
    %v577 = vpop.f32.mrb[0].mxu0
    %578 = vmatprep.mubr.bf16.mxu0 0
    %579 = vmatmul.mubr.bf16.gmra.mrb[0].mxu0 %v329
    %v580 = vpop.f32.mrb[0].mxu0
    %v581 = vadd.f32 0.0, %v580
    %v582 = vpop.f32.mrb[0].mxu0
    %v583 = vpop.f32.mrb[0].mxu0
    %v584 = vadd.f32 0.0, %v583
    %v585 = vpop.f32.mrb[0].mxu0
    %586 = vmatprep.mubr.bf16.mxu0 0
    %587 = vmatmul.mubr.bf16.gmra.mrb[0].mxu0 %v332
    %v588 = vpop.f32.mrb[0].mxu0
    %v589 = vadd.f32 0.0, %v588
    %v590 = vpop.f32.mrb[0].mxu0
    %v591 = vpop.f32.mrb[0].mxu0
    %v592 = vadd.f32 0.0, %v591
    %v593 = vpop.f32.mrb[0].mxu0
    %594 = vmatprep.mubr.bf16.mxu0 0
    %595 = vmatmul.mubr.bf16.gmra.mrb[0].mxu0 %v335
    %v596 = vpop.f32.mrb[0].mxu0
    %v597 = vadd.f32 0.0, %v596
    %v598 = vpop.f32.mrb[0].mxu0
    %v599 = vpop.f32.mrb[0].mxu0
    %v600 = vadd.f32 0.0, %v599
    %v601 = vpop.f32.mrb[0].mxu0
    %602 = vmatprep.mubr.bf16.mxu0 0
    %603 = vmatmul.mubr.bf16.gmra.mrb[0].mxu0 %v338
    %v604 = vpop.f32.mrb[0].mxu0
    %v605 = vadd.f32 0.0, %v604
    %v606 = vpop.f32.mrb[0].mxu0
    %v607 = vpop.f32.mrb[0].mxu0
    %v608 = vadd.f32 0.0, %v607
    %v609 = vpop.f32.mrb[0].mxu0
    %610 = vmatprep.mubr.bf16.mxu0 0
    %611 = vmatmul.mubr.bf16.gmra.mrb[0].mxu0 %v341
    %v612 = vpop.f32.mrb[0].mxu0
    %v613 = vadd.f32 0.0, %v612
    %v614 = vpop.f32.mrb[0].mxu0
    %v615 = vpop.f32.mrb[0].mxu0
    %v616 = vadd.f32 0.0, %v615
    %v617 = vpop.f32.mrb[0].mxu0
    %618 = vmatprep.mubr.bf16.mxu0 0
    %619 = vmatmul.mubr.bf16.gmra.mrb[0].mxu0 %v344
    %v620 = vpop.f32.mrb[0].mxu0
    %v621 = vadd.f32 0.0, %v620
    %v622 = vpop.f32.mrb[0].mxu0
    %v623 = vpop.f32.mrb[0].mxu0
    %v624 = vadd.f32 0.0, %v623
    %v625 = vpop.f32.mrb[0].mxu0
    %626 = vmatprep.mubr.bf16.mxu0 0
    %627 = vmatmul.mubr.bf16.gmra.mrb[0].mxu0 %v347
    %v628 = vpop.f32.mrb[0].mxu0
    %v629 = vadd.f32 0.0, %v628
    %v630 = vpop.f32.mrb[0].mxu0
    %v631 = vpop.f32.mrb[0].mxu0
    %v632 = vadd.f32 0.0, %v631
    %v633 = vpop.f32.mrb[0].mxu0
    %634 = vmatprep.mubr.bf16.mxu0 0
    %635 = vmatmul.mubr.bf16.gmra.mrb[0].mxu0 %v350
    %v636 = vpop.f32.mrb[0].mxu0
    %v637 = vadd.f32 0.0, %v636
    %v638 = vpop.f32.mrb[0].mxu0
    %v639 = vpop.f32.mrb[0].mxu0
    %v640 = vadd.f32 0.0, %v639
    %v641 = vpop.f32.mrb[0].mxu0
    %642 = vmatprep.mubr.bf16.mxu0 0
    %643 = vmatmul.mubr.bf16.gmra.mrb[0].mxu0 %v353
    %v644 = vpop.f32.mrb[0].mxu0
    %v645 = vadd.f32 0.0, %v644
    %v646 = vpop.f32.mrb[0].mxu0
    %v647 = vpop.f32.mrb[0].mxu0
    %v648 = vadd.f32 0.0, %v647
    %v649 = vpop.f32.mrb[0].mxu0
    %650 = vdwg.mxu0
    %v651 = vld [vmem:[%s2] sm:$0x1]
    %v653 = vlaneseq
    %v654 = vshrl.u32 %v653, 7
    %v655 = vsub.s32 0, %v654
    %v656 = vrot.slane %v651, %v655
    %v658 = vmul.f32 %v397, %v656
    %v659 = vmul.f32 %v400, %v656
    %v660 = vmul.f32 %v405, %v656
    %v661 = vmul.f32 %v408, %v656
    %v662 = vmul.f32 %v413, %v656
    %v663 = vmul.f32 %v416, %v656
    %v664 = vmul.f32 %v421, %v656
    %v665 = vmul.f32 %v424, %v656
    %v666 = vmul.f32 %v429, %v656
    %v667 = vmul.f32 %v432, %v656
    %v668 = vmul.f32 %v437, %v656
    %v669 = vmul.f32 %v440, %v656
    %v670 = vmul.f32 %v445, %v656
    %v671 = vmul.f32 %v448, %v656
    %v672 = vmul.f32 %v453, %v656
    %v673 = vmul.f32 %v456, %v656
    %v674 = vmul.f32 %v461, %v656
    %v675 = vmul.f32 %v464, %v656
    %v676 = vmul.f32 %v469, %v656
    %v677 = vmul.f32 %v472, %v656
    %v678 = vmul.f32 %v477, %v656
    %v679 = vmul.f32 %v480, %v656
    %v680 = vmul.f32 %v485, %v656
    %v681 = vmul.f32 %v488, %v656
    %v682 = vmul.f32 %v493, %v656
    %v683 = vmul.f32 %v496, %v656
    %v684 = vmul.f32 %v501, %v656
    %v685 = vmul.f32 %v504, %v656
    %v686 = vmul.f32 %v509, %v656
    %v687 = vmul.f32 %v512, %v656
    %v688 = vmul.f32 %v517, %v656
    %v689 = vmul.f32 %v520, %v656
    %v690 = vmul.f32 %v525, %v656
    %v691 = vmul.f32 %v528, %v656
    %v692 = vmul.f32 %v533, %v656
    %v693 = vmul.f32 %v536, %v656
    %v694 = vmul.f32 %v541, %v656
    %v695 = vmul.f32 %v544, %v656
    %v696 = vmul.f32 %v549, %v656
    %v697 = vmul.f32 %v552, %v656
    %v698 = vmul.f32 %v557, %v656
    %v699 = vmul.f32 %v560, %v656
    %v700 = vmul.f32 %v565, %v656
    %v701 = vmul.f32 %v568, %v656
    %v702 = vmul.f32 %v573, %v656
    %v703 = vmul.f32 %v576, %v656
    %v704 = vmul.f32 %v581, %v656
    %v705 = vmul.f32 %v584, %v656
    %v706 = vmul.f32 %v589, %v656
    %v707 = vmul.f32 %v592, %v656
    %v708 = vmul.f32 %v597, %v656
    %v709 = vmul.f32 %v600, %v656
    %v710 = vmul.f32 %v605, %v656
    %v711 = vmul.f32 %v608, %v656
    %v712 = vmul.f32 %v613, %v656
    %v713 = vmul.f32 %v616, %v656
    %v714 = vmul.f32 %v621, %v656
    %v715 = vmul.f32 %v624, %v656
    %v716 = vmul.f32 %v629, %v656
    %v717 = vmul.f32 %v632, %v656
    %v718 = vmul.f32 %v637, %v656
    %v719 = vmul.f32 %v640, %v656
    %v720 = vmul.f32 %v645, %v656
    %v721 = vmul.f32 %v648, %v656
    %v722 = vld [vmem:[%s3] sm:$0x1]
    %v724 = vlaneseq
    %v725 = vshrl.u32 %v724, 7
    %v726 = vsub.s32 0, %v725
    %v727 = vrot.slane %v722, %v726
    %v729 = vadd.f32 %v658, %v727
    %v730 = vadd.f32 %v659, %v727
    %v731 = vadd.f32 %v660, %v727
    %v732 = vadd.f32 %v661, %v727
    %v733 = vadd.f32 %v662, %v727
    %v734 = vadd.f32 %v663, %v727
    %v735 = vadd.f32 %v664, %v727
    %v736 = vadd.f32 %v665, %v727
    %v737 = vadd.f32 %v666, %v727
    %v738 = vadd.f32 %v667, %v727
    %v739 = vadd.f32 %v668, %v727
    %v740 = vadd.f32 %v669, %v727
    %v741 = vadd.f32 %v670, %v727
    %v742 = vadd.f32 %v671, %v727
    %v743 = vadd.f32 %v672, %v727
    %v744 = vadd.f32 %v673, %v727
    %v745 = vadd.f32 %v674, %v727
    %v746 = vadd.f32 %v675, %v727
    %v747 = vadd.f32 %v676, %v727
    %v748 = vadd.f32 %v677, %v727
    %v749 = vadd.f32 %v678, %v727
    %v750 = vadd.f32 %v679, %v727
    %v751 = vadd.f32 %v680, %v727
    %v752 = vadd.f32 %v681, %v727
    %v753 = vadd.f32 %v682, %v727
    %v754 = vadd.f32 %v683, %v727
    %v755 = vadd.f32 %v684, %v727
    %v756 = vadd.f32 %v685, %v727
    %v757 = vadd.f32 %v686, %v727
    %v758 = vadd.f32 %v687, %v727
    %v759 = vadd.f32 %v688, %v727
    %v760 = vadd.f32 %v689, %v727
    %v761 = vadd.f32 %v690, %v727
    %v762 = vadd.f32 %v691, %v727
    %v763 = vadd.f32 %v692, %v727
    %v764 = vadd.f32 %v693, %v727
    %v765 = vadd.f32 %v694, %v727
    %v766 = vadd.f32 %v695, %v727
    %v767 = vadd.f32 %v696, %v727
    %v768 = vadd.f32 %v697, %v727
    %v769 = vadd.f32 %v698, %v727
    %v770 = vadd.f32 %v699, %v727
    %v771 = vadd.f32 %v700, %v727
    %v772 = vadd.f32 %v701, %v727
    %v773 = vadd.f32 %v702, %v727
    %v774 = vadd.f32 %v703, %v727
    %v775 = vadd.f32 %v704, %v727
    %v776 = vadd.f32 %v705, %v727
    %v777 = vadd.f32 %v706, %v727
    %v778 = vadd.f32 %v707, %v727
    %v779 = vadd.f32 %v708, %v727
    %v780 = vadd.f32 %v709, %v727
    %v781 = vadd.f32 %v710, %v727
    %v782 = vadd.f32 %v711, %v727
    %v783 = vadd.f32 %v712, %v727
    %v784 = vadd.f32 %v713, %v727
    %v785 = vadd.f32 %v714, %v727
    %v786 = vadd.f32 %v715, %v727
    %v787 = vadd.f32 %v716, %v727
    %v788 = vadd.f32 %v717, %v727
    %v789 = vadd.f32 %v718, %v727
    %v790 = vadd.f32 %v719, %v727
    %v791 = vadd.f32 %v720, %v727
    %v792 = vadd.f32 %v721, %v727
    %v793 = vmax.f32 %v729, 0.0
    %v794 = vmax.f32 %v730, 0.0
    %v795 = vmax.f32 %v731, 0.0
    %v796 = vmax.f32 %v732, 0.0
    %v797 = vmax.f32 %v733, 0.0
    %v798 = vmax.f32 %v734, 0.0
    %v799 = vmax.f32 %v735, 0.0
    %v800 = vmax.f32 %v736, 0.0
    %v801 = vmax.f32 %v737, 0.0
    %v802 = vmax.f32 %v738, 0.0
    %v803 = vmax.f32 %v739, 0.0
    %v804 = vmax.f32 %v740, 0.0
    %v805 = vmax.f32 %v741, 0.0
    %v806 = vmax.f32 %v742, 0.0
    %v807 = vmax.f32 %v743, 0.0
    %v808 = vmax.f32 %v744, 0.0
    %v809 = vmax.f32 %v745, 0.0
    %v810 = vmax.f32 %v746, 0.0
    %v811 = vmax.f32 %v747, 0.0
    %v812 = vmax.f32 %v748, 0.0
    %v813 = vmax.f32 %v749, 0.0
    %v814 = vmax.f32 %v750, 0.0
    %v815 = vmax.f32 %v751, 0.0
    %v816 = vmax.f32 %v752, 0.0
    %v817 = vmax.f32 %v753, 0.0
    %v818 = vmax.f32 %v754, 0.0
    %v819 = vmax.f32 %v755, 0.0
    %v820 = vmax.f32 %v756, 0.0
    %v821 = vmax.f32 %v757, 0.0
    %v822 = vmax.f32 %v758, 0.0
    %v823 = vmax.f32 %v759, 0.0
    %v824 = vmax.f32 %v760, 0.0
    %v825 = vmax.f32 %v761, 0.0
    %v826 = vmax.f32 %v762, 0.0
    %v827 = vmax.f32 %v763, 0.0
    %v828 = vmax.f32 %v764, 0.0
    %v829 = vmax.f32 %v765, 0.0
    %v830 = vmax.f32 %v766, 0.0
    %v831 = vmax.f32 %v767, 0.0
    %v832 = vmax.f32 %v768, 0.0
    %v833 = vmax.f32 %v769, 0.0
    %v834 = vmax.f32 %v770, 0.0
    %v835 = vmax.f32 %v771, 0.0
    %v836 = vmax.f32 %v772, 0.0
    %v837 = vmax.f32 %v773, 0.0
    %v838 = vmax.f32 %v774, 0.0
    %v839 = vmax.f32 %v775, 0.0
    %v840 = vmax.f32 %v776, 0.0
    %v841 = vmax.f32 %v777, 0.0
    %v842 = vmax.f32 %v778, 0.0
    %v843 = vmax.f32 %v779, 0.0
    %v844 = vmax.f32 %v780, 0.0
    %v845 = vmax.f32 %v781, 0.0
    %v846 = vmax.f32 %v782, 0.0
    %v847 = vmax.f32 %v783, 0.0
    %v848 = vmax.f32 %v784, 0.0
    %v849 = vmax.f32 %v785, 0.0
    %v850 = vmax.f32 %v786, 0.0
    %v851 = vmax.f32 %v787, 0.0
    %v852 = vmax.f32 %v788, 0.0
    %v853 = vmax.f32 %v789, 0.0
    %v854 = vmax.f32 %v790, 0.0
    %v855 = vmax.f32 %v791, 0.0
    %v856 = vmax.f32 %v792, 0.0
    %v857 = vpack.c.bf16 %v794, %v793
    %v858 = vpack.c.bf16 %v796, %v795
    %v859 = vpack.c.bf16 %v798, %v797
    %v860 = vpack.c.bf16 %v800, %v799
    %v861 = vpack.c.bf16 %v802, %v801
    %v862 = vpack.c.bf16 %v804, %v803
    %v863 = vpack.c.bf16 %v806, %v805
    %v864 = vpack.c.bf16 %v808, %v807
    %v865 = vpack.c.bf16 %v810, %v809
    %v866 = vpack.c.bf16 %v812, %v811
    %v867 = vpack.c.bf16 %v814, %v813
    %v868 = vpack.c.bf16 %v816, %v815
    %v869 = vpack.c.bf16 %v818, %v817
    %v870 = vpack.c.bf16 %v820, %v819
    %v871 = vpack.c.bf16 %v822, %v821
    %v872 = vpack.c.bf16 %v824, %v823
    %v873 = vpack.c.bf16 %v826, %v825
    %v874 = vpack.c.bf16 %v828, %v827
    %v875 = vpack.c.bf16 %v830, %v829
    %v876 = vpack.c.bf16 %v832, %v831
    %v877 = vpack.c.bf16 %v834, %v833
    %v878 = vpack.c.bf16 %v836, %v835
    %v879 = vpack.c.bf16 %v838, %v837
    %v880 = vpack.c.bf16 %v840, %v839
    %v881 = vpack.c.bf16 %v842, %v841
    %v882 = vpack.c.bf16 %v844, %v843
    %v883 = vpack.c.bf16 %v846, %v845
    %v884 = vpack.c.bf16 %v848, %v847
    %v885 = vpack.c.bf16 %v850, %v849
    %v886 = vpack.c.bf16 %v852, %v851
    %v887 = vpack.c.bf16 %v854, %v853
    %v888 = vpack.c.bf16 %v856, %v855
    %v921 = vunpack.c.l.b16 %v857
    %v922 = vunpack.c.h.b16 %v857
    %v923 = vunpack.c.l.b16 %v858
    %v924 = vunpack.c.h.b16 %v858
    %v925 = vunpack.c.l.b16 %v859
    %v926 = vunpack.c.h.b16 %v859
    %v927 = vunpack.c.l.b16 %v860
    %v928 = vunpack.c.h.b16 %v860
    %v929 = vunpack.c.l.b16 %v861
    %v930 = vunpack.c.h.b16 %v861
    %v931 = vunpack.c.l.b16 %v862
    %v932 = vunpack.c.h.b16 %v862
    %v933 = vunpack.c.l.b16 %v863
    %v934 = vunpack.c.h.b16 %v863
    %v935 = vunpack.c.l.b16 %v864
    %v936 = vunpack.c.h.b16 %v864
    %v937 = vunpack.c.l.b16 %v865
    %v938 = vunpack.c.h.b16 %v865
    %v939 = vunpack.c.l.b16 %v866
    %v940 = vunpack.c.h.b16 %v866
    %v941 = vunpack.c.l.b16 %v867
    %v942 = vunpack.c.h.b16 %v867
    %v943 = vunpack.c.l.b16 %v868
    %v944 = vunpack.c.h.b16 %v868
    %v945 = vunpack.c.l.b16 %v869
    %v946 = vunpack.c.h.b16 %v869
    %v947 = vunpack.c.l.b16 %v870
    %v948 = vunpack.c.h.b16 %v870
    %v949 = vunpack.c.l.b16 %v871
    %v950 = vunpack.c.h.b16 %v871
    %v951 = vunpack.c.l.b16 %v872
    %v952 = vunpack.c.h.b16 %v872
    %v953 = vunpack.c.l.b16 %v873
    %v954 = vunpack.c.h.b16 %v873
    %v955 = vunpack.c.l.b16 %v874
    %v956 = vunpack.c.h.b16 %v874
    %v957 = vunpack.c.l.b16 %v875
    %v958 = vunpack.c.h.b16 %v875
    %v959 = vunpack.c.l.b16 %v876
    %v960 = vunpack.c.h.b16 %v876
    %v961 = vunpack.c.l.b16 %v877
    %v962 = vunpack.c.h.b16 %v877
    %v963 = vunpack.c.l.b16 %v878
    %v964 = vunpack.c.h.b16 %v878
    %v965 = vunpack.c.l.b16 %v879
    %v966 = vunpack.c.h.b16 %v879
    %v967 = vunpack.c.l.b16 %v880
    %v968 = vunpack.c.h.b16 %v880
    %v969 = vunpack.c.l.b16 %v881
    %v970 = vunpack.c.h.b16 %v881
    %v971 = vunpack.c.l.b16 %v882
    %v972 = vunpack.c.h.b16 %v882
    %v973 = vunpack.c.l.b16 %v883
    %v974 = vunpack.c.h.b16 %v883
    %v975 = vunpack.c.l.b16 %v884
    %v976 = vunpack.c.h.b16 %v884
    %v977 = vunpack.c.l.b16 %v885
    %v978 = vunpack.c.h.b16 %v885
    %v979 = vunpack.c.l.b16 %v886
    %v980 = vunpack.c.h.b16 %v886
    %v981 = vunpack.c.l.b16 %v887
    %v982 = vunpack.c.h.b16 %v887
    %v983 = vunpack.c.l.b16 %v888
    %v984 = vunpack.c.h.b16 %v888
    %v985 = vpack.c.b16 %v921, %v921
    %v986 = vpack.c.b16 %v922, %v922
    %v987 = vpack.c.b16 %v923, %v923
    %v988 = vpack.c.b16 %v924, %v924
    %v989 = vpack.c.b16 %v925, %v925
    %v990 = vpack.c.b16 %v926, %v926
    %v991 = vpack.c.b16 %v927, %v927
    %v992 = vpack.c.b16 %v928, %v928
    %v993 = vpack.c.b16 %v929, %v929
    %v994 = vpack.c.b16 %v930, %v930
    %v995 = vpack.c.b16 %v931, %v931
    %v996 = vpack.c.b16 %v932, %v932
    %v997 = vpack.c.b16 %v933, %v933
    %v998 = vpack.c.b16 %v934, %v934
    %v999 = vpack.c.b16 %v935, %v935
    %v1000 = vpack.c.b16 %v936, %v936
    %v1001 = vpack.c.b16 %v937, %v937
    %v1002 = vpack.c.b16 %v938, %v938
    %v1003 = vpack.c.b16 %v939, %v939
    %v1004 = vpack.c.b16 %v940, %v940
    %v1005 = vpack.c.b16 %v941, %v941
    %v1006 = vpack.c.b16 %v942, %v942
    %v1007 = vpack.c.b16 %v943, %v943
    %v1008 = vpack.c.b16 %v944, %v944
    %v1009 = vpack.c.b16 %v945, %v945
    %v1010 = vpack.c.b16 %v946, %v946
    %v1011 = vpack.c.b16 %v947, %v947
    %v1012 = vpack.c.b16 %v948, %v948
    %v1013 = vpack.c.b16 %v949, %v949
    %v1014 = vpack.c.b16 %v950, %v950
    %v1015 = vpack.c.b16 %v951, %v951
    %v1016 = vpack.c.b16 %v952, %v952
    %v1017 = vpack.c.b16 %v953, %v953
    %v1018 = vpack.c.b16 %v954, %v954
    %v1019 = vpack.c.b16 %v955, %v955
    %v1020 = vpack.c.b16 %v956, %v956
    %v1021 = vpack.c.b16 %v957, %v957
    %v1022 = vpack.c.b16 %v958, %v958
    %v1023 = vpack.c.b16 %v959, %v959
    %v1024 = vpack.c.b16 %v960, %v960
    %v1025 = vpack.c.b16 %v961, %v961
    %v1026 = vpack.c.b16 %v962, %v962
    %v1027 = vpack.c.b16 %v963, %v963
    %v1028 = vpack.c.b16 %v964, %v964
    %v1029 = vpack.c.b16 %v965, %v965
    %v1030 = vpack.c.b16 %v966, %v966
    %v1031 = vpack.c.b16 %v967, %v967
    %v1032 = vpack.c.b16 %v968, %v968
    %v1033 = vpack.c.b16 %v969, %v969
    %v1034 = vpack.c.b16 %v970, %v970
    %v1035 = vpack.c.b16 %v971, %v971
    %v1036 = vpack.c.b16 %v972, %v972
    %v1037 = vpack.c.b16 %v973, %v973
    %v1038 = vpack.c.b16 %v974, %v974
    %v1039 = vpack.c.b16 %v975, %v975
    %v1040 = vpack.c.b16 %v976, %v976
    %v1041 = vpack.c.b16 %v977, %v977
    %v1042 = vpack.c.b16 %v978, %v978
    %v1043 = vpack.c.b16 %v979, %v979
    %v1044 = vpack.c.b16 %v980, %v980
    %v1045 = vpack.c.b16 %v981, %v981
    %v1046 = vpack.c.b16 %v982, %v982
    %v1047 = vpack.c.b16 %v983, %v983
    %v1048 = vpack.c.b16 %v984, %v984
    %vm1113 = vcmask 191488
    %1114 = vst.msk [vmem:[#allocation2] sm:$0xf] %vm1113, %v985
    %1115 = vst.msk [vmem:[#allocation2 + $0x4] sm:$0xf] %vm1113, %v986
    %1116 = vst.msk [vmem:[#allocation2 + $0x8] sm:$0xf] %vm1113, %v987
    %1117 = vst.msk [vmem:[#allocation2 + $0xc] sm:$0xf] %vm1113, %v988
    %1118 = vst.msk [vmem:[#allocation2 + $0x10] sm:$0xf] %vm1113, %v989
    %1119 = vst.msk [vmem:[#allocation2 + $0x14] sm:$0xf] %vm1113, %v990
    %1120 = vst.msk [vmem:[#allocation2 + $0x18] sm:$0xf] %vm1113, %v991
    %1121 = vst.msk [vmem:[#allocation2 + $0x1c] sm:$0xf] %vm1113, %v992
    %1122 = vst.msk [vmem:[#allocation2 + $0x20] sm:$0xf] %vm1113, %v993
    %1123 = vst.msk [vmem:[#allocation2 + $0x24] sm:$0xf] %vm1113, %v994
    %1124 = vst.msk [vmem:[#allocation2 + $0x28] sm:$0xf] %vm1113, %v995
    %1125 = vst.msk [vmem:[#allocation2 + $0x2c] sm:$0xf] %vm1113, %v996
    %1126 = vst.msk [vmem:[#allocation2 + $0x30] sm:$0xf] %vm1113, %v997
    %1127 = vst.msk [vmem:[#allocation2 + $0x34] sm:$0xf] %vm1113, %v998
    %1128 = vst.msk [vmem:[#allocation2 + $0x38] sm:$0xf] %vm1113, %v999
    %1129 = vst.msk [vmem:[#allocation2 + $0x3c] sm:$0xf] %vm1113, %v1000
    %1130 = vst.msk [vmem:[#allocation2 + $0x40] sm:$0xf] %vm1113, %v1001
    %1131 = vst.msk [vmem:[#allocation2 + $0x44] sm:$0xf] %vm1113, %v1002
    %1132 = vst.msk [vmem:[#allocation2 + $0x48] sm:$0xf] %vm1113, %v1003
    %1133 = vst.msk [vmem:[#allocation2 + $0x4c] sm:$0xf] %vm1113, %v1004
    %1134 = vst.msk [vmem:[#allocation2 + $0x50] sm:$0xf] %vm1113, %v1005
    %1135 = vst.msk [vmem:[#allocation2 + $0x54] sm:$0xf] %vm1113, %v1006
    %1136 = vst.msk [vmem:[#allocation2 + $0x58] sm:$0xf] %vm1113, %v1007
    %1137 = vst.msk [vmem:[#allocation2 + $0x5c] sm:$0xf] %vm1113, %v1008
    %1138 = vst.msk [vmem:[#allocation2 + $0x60] sm:$0xf] %vm1113, %v1009
    %1139 = vst.msk [vmem:[#allocation2 + $0x64] sm:$0xf] %vm1113, %v1010
    %1140 = vst.msk [vmem:[#allocation2 + $0x68] sm:$0xf] %vm1113, %v1011
    %1141 = vst.msk [vmem:[#allocation2 + $0x6c] sm:$0xf] %vm1113, %v1012
    %1142 = vst.msk [vmem:[#allocation2 + $0x70] sm:$0xf] %vm1113, %v1013
    %1143 = vst.msk [vmem:[#allocation2 + $0x74] sm:$0xf] %vm1113, %v1014
    %1144 = vst.msk [vmem:[#allocation2 + $0x78] sm:$0xf] %vm1113, %v1015
    %1145 = vst.msk [vmem:[#allocation2 + $0x7c] sm:$0xf] %vm1113, %v1016
    %1146 = vst.msk [vmem:[#allocation2 + $0x80] sm:$0xf] %vm1113, %v1017
    %1147 = vst.msk [vmem:[#allocation2 + $0x84] sm:$0xf] %vm1113, %v1018
    %1148 = vst.msk [vmem:[#allocation2 + $0x88] sm:$0xf] %vm1113, %v1019
    %1149 = vst.msk [vmem:[#allocation2 + $0x8c] sm:$0xf] %vm1113, %v1020
    %1150 = vst.msk [vmem:[#allocation2 + $0x90] sm:$0xf] %vm1113, %v1021
    %1151 = vst.msk [vmem:[#allocation2 + $0x94] sm:$0xf] %vm1113, %v1022
    %1152 = vst.msk [vmem:[#allocation2 + $0x98] sm:$0xf] %vm1113, %v1023
    %1153 = vst.msk [vmem:[#allocation2 + $0x9c] sm:$0xf] %vm1113, %v1024
    %1154 = vst.msk [vmem:[#allocation2 + $0xa0] sm:$0xf] %vm1113, %v1025
    %1155 = vst.msk [vmem:[#allocation2 + $0xa4] sm:$0xf] %vm1113, %v1026
    %1156 = vst.msk [vmem:[#allocation2 + $0xa8] sm:$0xf] %vm1113, %v1027
    %1157 = vst.msk [vmem:[#allocation2 + $0xac] sm:$0xf] %vm1113, %v1028
    %1158 = vst.msk [vmem:[#allocation2 + $0xb0] sm:$0xf] %vm1113, %v1029
    %1159 = vst.msk [vmem:[#allocation2 + $0xb4] sm:$0xf] %vm1113, %v1030
    %1160 = vst.msk [vmem:[#allocation2 + $0xb8] sm:$0xf] %vm1113, %v1031
    %1161 = vst.msk [vmem:[#allocation2 + $0xbc] sm:$0xf] %vm1113, %v1032
    %1162 = vst.msk [vmem:[#allocation2 + $0xc0] sm:$0xf] %vm1113, %v1033
    %1163 = vst.msk [vmem:[#allocation2 + $0xc4] sm:$0xf] %vm1113, %v1034
    %1164 = vst.msk [vmem:[#allocation2 + $0xc8] sm:$0xf] %vm1113, %v1035
    %1165 = vst.msk [vmem:[#allocation2 + $0xcc] sm:$0xf] %vm1113, %v1036
    %1166 = vst.msk [vmem:[#allocation2 + $0xd0] sm:$0xf] %vm1113, %v1037
    %1167 = vst.msk [vmem:[#allocation2 + $0xd4] sm:$0xf] %vm1113, %v1038
    %1168 = vst.msk [vmem:[#allocation2 + $0xd8] sm:$0xf] %vm1113, %v1039
    %1169 = vst.msk [vmem:[#allocation2 + $0xdc] sm:$0xf] %vm1113, %v1040
    %1170 = vst.msk [vmem:[#allocation2 + $0xe0] sm:$0xf] %vm1113, %v1041
    %1171 = vst.msk [vmem:[#allocation2 + $0xe4] sm:$0xf] %vm1113, %v1042
    %1172 = vst.msk [vmem:[#allocation2 + $0xe8] sm:$0xf] %vm1113, %v1043
    %1173 = vst.msk [vmem:[#allocation2 + $0xec] sm:$0xf] %vm1113, %v1044
    %1174 = vst.msk [vmem:[#allocation2 + $0xf0] sm:$0xf] %vm1113, %v1045
    %1175 = vst.msk [vmem:[#allocation2 + $0xf4] sm:$0xf] %vm1113, %v1046
    %1176 = vst.msk [vmem:[#allocation2 + $0xf8] sm:$0xf] %vm1113, %v1047
    %1177 = vst.msk [vmem:[#allocation2 + $0xfc] sm:$0xf] %vm1113, %v1048
    // Predicated region
    $region18: #{conv3x3_bn.1} parent=1 // pred_check
      _
    $region19: #{conv3x3_bn.1} parent=1 // pred_check_branch
      %1179 = sbr.rel (0) target = $region21
    $region20: #{conv3x3_bn.1} parent=1 // pred_region
      %s1181 = ssub.s32 4096, 4096
      %1182 = vsyncadd [#allocation3], %s1181
      %s1183 = sshll.u32 [#allocation2], 4
      %s1184 = int_to_ptr.vmem [resolvable:$true] %s1183
      %1189 = dma.vmem_to_hbm [thread:$0]  %s1184, 4096, %s4, [#allocation3], 64, 64, 4
    $region21: #{conv3x3_bn.1} parent=1 // pred_fallthru
      _
    // Predicated region
    $region22: #{conv3x3_bn.1} parent=1 // pred_check
      _
    $region23: #{conv3x3_bn.1} parent=1 // pred_check_branch
      %1191 = sbr.rel (0) target = $region25
    $region24: #{conv3x3_bn.1} parent=1 // pred_region
      %1192 = dma.done [#allocation3], 4096
    $region25: #{conv3x3_bn.1} parent=1 // pred_fallthru
      _
    %1193 = vsyncpa [#allocation3], 1

</llo_original>
